<compile_context>
chip_gen: v5e
topology: v5e:2x2
jax: 0.10.0
libtpu: 0.0.40
codegen_flags: <defaults>
</compile_context>

<pallas_src>
import jax
import jax.numpy as jnp
from jax.experimental import pallas as pl
from jax.experimental.pallas import tpu as pltpu

_LANE = 128
_SUBLANE = 8


def _round_up(x, m):
    return ((x + m - 1) // m) * m


# ---------------------------------------------------------------------------
# Kernels (one grid step = one head x one row tile)
# ---------------------------------------------------------------------------
def _heads_kernel(x_ref, w_ref, o_ref):
    # Eval mode: y = sigmoid(x @ W^T).  x/w already in the compute dtype
    # (bf16 by default) -> no in-kernel casts; f32 accumulation on the MXU.
    z = jnp.dot(x_ref[...], w_ref[...], preferred_element_type=jnp.float32)
    o_ref[...] = jax.nn.sigmoid(z).astype(o_ref.dtype)


def _heads_dropout_kernel(x_ref, keep_ref, w_ref, o_ref):
    # Training mode: keep is PRE-SCALED ({0, 1/(1-p)} for the dropout head,
    # all-ones for the order head) -> a single multiply, no broadcasted scalar.
    z = jnp.dot(x_ref[...] * keep_ref[...], w_ref[...],
                preferred_element_type=jnp.float32)
    o_ref[...] = jax.nn.sigmoid(z).astype(o_ref.dtype)


# ---------------------------------------------------------------------------
# One-time weight prep (outside the per-call path)
# ---------------------------------------------------------------------------
def prepare_head_weights(w_main, w_order, compute_dtype=jnp.bfloat16):
    """Torch-layout weights (out_channel, node_dim) -> stacked (2, node_dim,
    C_pad) in `compute_dtype`, output columns zero-padded to a multiple of 128
    so kernel stores are lane-dense.  Call ONCE at setup."""
    assert w_main.shape == w_order.shape
    out_c = w_main.shape[0]
    c_pad = _round_up(out_c, _LANE)
    stacked = []
    for w in (w_main, w_order):
        wt = jnp.asarray(w, jnp.float32).T                    # (node_dim, out_c)
        if c_pad != out_c:
            wt = jnp.pad(wt, ((0, 0), (0, c_pad - out_c)))
        stacked.append(wt)
    return jnp.stack(stacked).astype(compute_dtype), out_c


# ---------------------------------------------------------------------------
# Fused wrapper: both heads in one pallas_call
# ---------------------------------------------------------------------------
def fused_sigmoid_heads(x_main, x_order, ws_pad, out_dim, *, keep_mask=None,
                        p=0.3, tm_max=512, out_dtype=jnp.float32):
    """(y_main, order_task_y) = (sigmoid(dropout(x_main) @ Wm^T),
                                 sigmoid(x_order @ Wo^T))

    x_main:    (..., node_dim)  rows for linear_main_task (dropout applies here)
    x_order:   (..., node_dim)  rows for linear_order_task (no dropout)
    ws_pad:    (2, node_dim, C_pad) from prepare_head_weights (its dtype is the
               compute dtype fed to the MXU)
    keep_mask: optional (..., node_dim) 0/1 mask for x_main (training mode)
    """
    d = x_main.shape[-1]
    assert x_order.shape[-1] == d and ws_pad.shape[0] == 2 and ws_pad.shape[1] == d
    c_pad = ws_pad.shape[-1]
    compute_dtype = ws_pad.dtype

    xm = x_main.reshape(-1, d)
    xo = x_order.reshape(-1, d)
    m_main, m_order = xm.shape[0], xo.shape[0]
    m_max = max(m_main, m_order)

    # Row tiling: collapse to a single tile for small M (no per-step pipeline
    # overhead); otherwise pick the smallest 8-aligned tile covering m_max so
    # padding is minimal (review item 7).
    if m_max <= tm_max:
        n_tiles = 1
        tm = _round_up(m_max, _SUBLANE)
    else:
        n_tiles = pl.cdiv(m_max, tm_max)
        tm = _round_up(pl.cdiv(m_max, n_tiles), _SUBLANE)
    m_pad = tm * n_tiles

    def pad_rows(a, rows):
        a = a.astype(compute_dtype)          # fused into the stack/pad copy
        if rows != m_pad:
            a = jnp.pad(a, ((0, m_pad - rows), (0, 0)))
        return a

    # (2, m_pad, d) in compute dtype; padded rows produce sigmoid(0)=0.5 and
    # are sliced off below.
    xs = jnp.stack([pad_rows(xm, m_main), pad_rows(xo, m_order)])

    x_spec = pl.BlockSpec((None, tm, d), lambda h, i: (h, i, 0))
    w_spec = pl.BlockSpec((None, d, c_pad), lambda h, i: (h, 0, 0))
    o_spec = pl.BlockSpec((None, tm, c_pad), lambda h, i: (h, i, 0))

    if keep_mask is None:
        kernel = _heads_kernel
        in_specs = [x_spec, w_spec]
        operands = (xs, ws_pad)
    else:
        inv_keep = 1.0 / (1.0 - p)
        km = keep_mask.reshape(-1, d).astype(jnp.float32) * inv_keep
        keeps = jnp.stack([pad_rows(km, m_main),                      # main head
                           jnp.ones((m_pad, d), compute_dtype)])     # order head
        kernel = _heads_dropout_kernel
        in_specs = [x_spec, x_spec, w_spec]
        operands = (xs, keeps, ws_pad)

    out = pl.pallas_call(
        kernel,
        out_shape=jax.ShapeDtypeStruct((2, m_pad, c_pad), out_dtype),
        grid_spec=pltpu.PrefetchScalarGridSpec(
            num_scalar_prefetch=0,
            grid=(2, n_tiles),
            in_specs=in_specs,
            out_specs=o_spec,
        ),
        compiler_params=pltpu.CompilerParams(
            dimension_semantics=("parallel", "parallel"),
        ),
    )(*operands)

    y_main = out[0, :m_main, :out_dim].reshape(*x_main.shape[:-1], out_dim)
    y_order = out[1, :m_order, :out_dim].reshape(*x_order.shape[:-1], out_dim)
    return y_main, y_order


# ---------------------------------------------------------------------------
# Pure-JAX reference (matches PyTorch semantics)
# ---------------------------------------------------------------------------
def _ref_head(x, w, keep_mask=None, p=0.3):
    x = jnp.asarray(x, jnp.float32)
    if keep_mask is not None:
        x = x * keep_mask.astype(jnp.float32) / (1.0 - p)
    z = jnp.matmul(x, jnp.asarray(w, jnp.float32).T,
                   precision=jax.lax.Precision.HIGHEST)
    return jax.nn.sigmoid(z)


if __name__ == "__main__":
    key = jax.random.PRNGKey(0)
    k_pe, k_gn, k_wm, k_wo, k_do, k_big = jax.random.split(key, 6)

    # Small shapes consistent with Basic_GNN_LSTM:
    # node_dim = 110 (6 categorical embeddings of width 10 + 50-d traj feature),
    # out_channel = 1 (binary BCE head), batch = 8 orders, 16 collected GNN rows.
    node_dim, out_channel = 110, 1
    batch, n_gnn_rows = 8, 16

    predict_emb = jax.random.normal(k_pe, (batch, node_dim), jnp.float32)
    gnn_rows = jax.random.normal(k_gn, (n_gnn_rows, node_dim), jnp.float32)

    # torch.nn.Linear default init: U(-1/sqrt(fan_in), 1/sqrt(fan_in)), weight (out, in).
    bound = 1.0 / (node_dim ** 0.5)
    w_main = jax.random.uniform(k_wm, (out_channel, node_dim), jnp.float32, -bound, bound)
    w_order = jax.random.uniform(k_wo, (out_channel, node_dim), jnp.float32, -bound, bound)

    # One-time weight prep (transpose + lane padding + stack + bf16).
    ws_bf16, _ = prepare_head_weights(w_main, w_order)                       # bf16 MXU path
    ws_f32, _ = prepare_head_weights(w_main, w_order, compute_dtype=jnp.float32)

    # Eval mode (dropout identity -> exact PyTorch .eval() semantics), one fused call.
    y_main, order_y = jax.block_until_ready(
        fused_sigmoid_heads(predict_emb, gnn_rows, ws_bf16, out_channel))
    assert y_main.shape == (batch, out_channel)
    assert order_y.shape == (n_gnn_rows, out_channel)
    assert jnp.allclose(y_main, _ref_head(predict_emb, w_main), atol=2e-2)
    assert jnp.allclose(order_y, _ref_head(gnn_rows, w_order), atol=2e-2)

    # f32 compute path (tighter structural check of the fused kernel).
    y_main32, order_y32 = jax.block_until_ready(
        fused_sigmoid_heads(predict_emb, gnn_rows, ws_f32, out_channel))
    assert jnp.allclose(y_main32, _ref_head(predict_emb, w_main), atol=1e-3)
    assert jnp.allclose(order_y32, _ref_head(gnn_rows, w_order), atol=1e-3)

    # Training mode: Bernoulli keep-mask on the main head only (as in forward()),
    # pre-scaled to {0, 1/(1-p)} and fused in-kernel; order head unaffected.
    p = 0.3
    keep = jax.random.bernoulli(k_do, 1.0 - p, (batch, node_dim))
    y_tr, order_tr = jax.block_until_ready(
        fused_sigmoid_heads(predict_emb, gnn_rows, ws_bf16, out_channel,
                            keep_mask=keep, p=p))
    assert jnp.allclose(y_tr, _ref_head(predict_emb, w_main, keep, p), atol=2e-2)
    assert jnp.allclose(order_tr, _ref_head(gnn_rows, w_order), atol=2e-2)

    # Row-tiled path: multiple "parallel" row tiles with minimal padding
    # (m=200, tm_max=64 -> 4 tiles of 56 rows, not padded up to 256).
    big = jax.random.normal(k_big, (200, node_dim), jnp.float32)
    y_big_main, y_big_order = jax.block_until_ready(
        fused_sigmoid_heads(predict_emb, big, ws_bf16, out_channel, tm_max=64))
    assert jnp.allclose(y_big_main, _ref_head(predict_emb, w_main), atol=2e-2)
    assert jnp.allclose(y_big_order, _ref_head(big, w_order), atol=2e-2)

    print("KERNEL_OK")
</pallas_src>

<mosaic_0001>
module attributes {stable_mosaic.version = 11 : i64} {
  func.func @_heads_kernel(%arg0: i32, %arg1: i32, %arg2: memref<1x16x110xbf16, #tpu.memory_space<vmem>>, %arg3: memref<1x110x128xbf16, #tpu.memory_space<vmem>>, %arg4: memref<1x16x128xf32, #tpu.memory_space<vmem>>) attributes {dimension_semantics = [#tpu.dimension_semantics<parallel>, #tpu.dimension_semantics<parallel>], iteration_bounds = array<i64: 2, 1>, scalar_prefetch = 0 : i64, scratch_operands = 0 : i64, tpu.core_type = #tpu.core_type<tc>, window_params = [{transform_indices = @transform_0, window_bounds = array<i64: 1, 16, 110>}, {transform_indices = @transform_1, window_bounds = array<i64: 1, 110, 128>}, {transform_indices = @transform_2, window_bounds = array<i64: 1, 16, 128>}]} {
    %c0 = arith.constant 0 : index
    %c0_0 = arith.constant 0 : index
    %c0_1 = arith.constant 0 : index
    %0 = vector.load %arg2[%c0, %c0_0, %c0_1] : memref<1x16x110xbf16, #tpu.memory_space<vmem>>, vector<1x16x110xbf16>
    %1 = vector.shape_cast %0 : vector<1x16x110xbf16> to vector<16x110xbf16>
    %c0_2 = arith.constant 0 : index
    %c0_3 = arith.constant 0 : index
    %c0_4 = arith.constant 0 : index
    %2 = vector.load %arg3[%c0_2, %c0_3, %c0_4] : memref<1x110x128xbf16, #tpu.memory_space<vmem>>, vector<1x110x128xbf16>
    %3 = vector.shape_cast %2 : vector<1x110x128xbf16> to vector<110x128xbf16>
    %cst = arith.constant dense<0.000000e+00> : vector<16x128xf32>
    %4 = tpu.matmul %1, %3, %cst {dimension_numbers = #tpu.dot_dimension_numbers<[1], [0], [0], [1], [0, 0, 1, 1], [], []>} : vector<16x110xbf16>, vector<110x128xbf16>, vector<16x128xf32> -> vector<16x128xf32>
    %5 = arith.negf %4 : vector<16x128xf32>
    %6 = math.exp %5 : vector<16x128xf32>
    %cst_5 = arith.constant 1.000000e+00 : f32
    %7 = vector.broadcast %cst_5 : f32 to vector<16x128xf32>
    %8 = arith.addf %7, %6 : vector<16x128xf32>
    %9 = arith.divf %7, %8 : vector<16x128xf32>
    %c0_6 = arith.constant 0 : index
    %c0_7 = arith.constant 0 : index
    %c0_8 = arith.constant 0 : index
    %10 = vector.load %arg4[%c0_6, %c0_7, %c0_8] : memref<1x16x128xf32, #tpu.memory_space<vmem>>, vector<1x16x128xf32>
    %11 = vector.shape_cast %10 : vector<1x16x128xf32> to vector<16x128xf32>
    %12 = vector.shape_cast %9 : vector<16x128xf32> to vector<1x16x128xf32>
    tpu.vector_store %arg4[%c0_6, %c0_7, %c0_8], %12 {strides = array<i32>} : memref<1x16x128xf32, #tpu.memory_space<vmem>>, vector<1x16x128xf32>,
    return
  }
  func.func @transform_0(%arg0: i32, %arg1: i32) -> (i32, i32, i32) {
    %c0_i32 = arith.constant 0 : i32
    %c0_i32_0 = arith.constant 0 : i32
    return %arg0, %arg1, %c0_i32 : i32, i32, i32
  }
  func.func @transform_1(%arg0: i32, %arg1: i32) -> (i32, i32, i32) {
    %c0_i32 = arith.constant 0 : i32
    %c0_i32_0 = arith.constant 0 : i32
    %c0_i32_1 = arith.constant 0 : i32
    return %arg0, %c0_i32, %c0_i32_0 : i32, i32, i32
  }
  func.func @transform_2(%arg0: i32, %arg1: i32) -> (i32, i32, i32) {
    %c0_i32 = arith.constant 0 : i32
    %c0_i32_0 = arith.constant 0 : i32
    return %arg0, %arg1, %c0_i32 : i32, i32, i32
  }
}

</mosaic_0001>

<llo_original>
// kernel: tpu_custom_call.1
$region0: #{tpu_custom_call.1}
  #allocation0 [shape = 'u32[]', space=smem, size = 0x4, offset = 0x4, fixed_abs, tag = 'smem constant byte address 0x4 - core index']
  #allocation1 [shape = 'u32[72,128]{1,0:T(1,128)}', space=vmem, size = 0x9000, scoped, tag = 'internal scratch']
  %s0 = inlined_call_operand.vmem [shape: bf16[2,16,110], index: 0, kind: input, shape index: {}]
  %s1 = inlined_call_operand.vmem [shape: bf16[2,110,128], index: 1, kind: input, shape index: {}]
  %s2 = inlined_call_operand.hbm [shape: f32[2,16,128], index: 2, kind: output, shape index: {}]
  %s3 = sld [smem:[#allocation0]]
  $region41: #{tpu_custom_call.1} parent=0
    _
  %s5 = ssub.s32 1, %s3
  %s6 = scalar_select 0, %s5, %s3
  $region1: #{tpu_custom_call.1} parent=0
    #allocation2 [shape = 'u8[16384]{0}', space=vmem, size = 0x4000, scoped, tag = 'output window, operand 0']
    #allocation3 [shape = 's32[2]{0}', space=sflag, size = 0x8, scoped, tag = 'scoped memory for tpu_custom_call.1']
    %7 = vsyncpa [#allocation3], 0
    %s8 = scalar_lea.sflag [#allocation3], 1
    %9 = vsyncpa %s8, 0
    loop: start=0, step=1, limit=4
    $region2: #{tpu_custom_call.1} parent=1 // loop_pre_header
      _
    $region3: #{tpu_custom_call.1} parent=1 // loop_header
      %s11 = sphi 0, %s15
      %p12 = scmp.ge.s32.totalorder %s11, 4
      %s18 = sphi 0, %s30
      %s19 = sphi 0, %s26
      %s20 = sphi 0, %s18
      %s21 = sphi 0, %s19
      %s22 = sphi 0, %s20
      %s23 = sphi 0, %s21
      %s35 = sphi 0, %s37
      %s38 = sphi 0, %s35
      %s39 = sphi 0, %s38
      %s55 = sphi 0, %s39
      %s61 = sphi 0, %s63
      %s64 = sphi 0, %s61
      %s65 = sphi 0, %s64
      %s81 = sphi 0, %s65
      %s89 = sphi 0, %s91
      %s92 = sphi 0, %s89
      %s93 = sphi 0, %s92
      %s109 = sphi 0, %s93
    $region4: #{tpu_custom_call.1} parent=1 // loop_header_branch
      %14 = sbr.rel (%p12) target = $region8
    $region5: #{tpu_custom_call.1} parent=1 // loop_body
      %s16 = ssub.s32 %s11, 1
      %s17 = ssub.s32 %s11, 2
      %s24 = sadd.s32 1, %s19
      %p25 = scmp.ge.s32.totalorder %s24, 1
      %s26 = scalar_select %p25, 0, %s24
      %s27 = sadd.s32 1, %s18
      %s28 = scalar_select %p25, %s27, %s18
      %p29 = scmp.ge.s32.totalorder %s28, 2
      %s30 = scalar_select %p29, 0, %s28
      %s31 = ssub.s32 %s18, %s30
      %s32 = ssub.s32 %s19, %s26
      %s33 = sor.u32 %s31, %s32
      %p34 = scmp.eq.s32.totalorder %s33, 0
      %s36 = sadd.s32 %s35, 1
      %s37 = scalar_select %p34, %s35, %s36
      %p40 = pneg %p34
      %p41 = scmp.eq.s32.totalorder %s11, 1
      %p42 = por %p40, %p41
      %p43 = scmp.ne.s32.totalorder %s35, %s38
      %p44 = scmp.eq.s32.totalorder %s11, 0
      %p45 = por %p43, %p44
      %p46 = scmp.ne.s32.totalorder %s35, %s38
      %p47 = scmp.eq.s32.totalorder %s16, 1
      %p48 = por %p46, %p47
      %p49 = scmp.ne.s32.totalorder %s38, %s39
      %p50 = scmp.eq.s32.totalorder %s16, 0
      %p51 = por %p49, %p50
      %p52 = scmp.ne.s32.totalorder %s38, %s39
      %p53 = scmp.eq.s32.totalorder %s17, 1
      %p54 = por %p52, %p53
      %p56 = scmp.ne.s32.totalorder %s39, %s55
      %p57 = scmp.eq.s32.totalorder %s17, 0
      %p58 = por %p56, %p57
      %s59 = ssub.s32 %s18, %s30
      %p60 = scmp.eq.s32.totalorder %s59, 0
      %s62 = sadd.s32 %s61, 1
      %s63 = scalar_select %p60, %s61, %s62
      %p66 = pneg %p60
      %p67 = scmp.eq.s32.totalorder %s11, 1
      %p68 = por %p66, %p67
      %p69 = scmp.ne.s32.totalorder %s61, %s64
      %p70 = scmp.eq.s32.totalorder %s11, 0
      %p71 = por %p69, %p70
      %p72 = scmp.ne.s32.totalorder %s61, %s64
      %p73 = scmp.eq.s32.totalorder %s16, 1
      %p74 = por %p72, %p73
      %p75 = scmp.ne.s32.totalorder %s64, %s65
      %p76 = scmp.eq.s32.totalorder %s16, 0
      %p77 = por %p75, %p76
      %p78 = scmp.ne.s32.totalorder %s64, %s65
      %p79 = scmp.eq.s32.totalorder %s17, 1
      %p80 = por %p78, %p79
      %p82 = scmp.ne.s32.totalorder %s65, %s81
      %p83 = scmp.eq.s32.totalorder %s17, 0
      %p84 = por %p82, %p83
      %s85 = ssub.s32 %s18, %s30
      %s86 = ssub.s32 %s19, %s26
      %s87 = sor.u32 %s85, %s86
      %p88 = scmp.eq.s32.totalorder %s87, 0
      %s90 = sadd.s32 %s89, 1
      %s91 = scalar_select %p88, %s89, %s90
      %p94 = pneg %p88
      %p95 = scmp.eq.s32.totalorder %s11, 1
      %p96 = por %p94, %p95
      %p97 = scmp.ne.s32.totalorder %s89, %s92
      %p98 = scmp.eq.s32.totalorder %s11, 0
      %p99 = por %p97, %p98
      %p100 = scmp.ne.s32.totalorder %s89, %s92
      %p101 = scmp.eq.s32.totalorder %s16, 1
      %p102 = por %p100, %p101
      %p103 = scmp.ne.s32.totalorder %s92, %s93
      %p104 = scmp.eq.s32.totalorder %s16, 0
      %p105 = por %p103, %p104
      %p106 = scmp.ne.s32.totalorder %s92, %s93
      %p107 = scmp.eq.s32.totalorder %s17, 1
      %p108 = por %p106, %p107
      %p110 = scmp.ne.s32.totalorder %s93, %s109
      %p111 = scmp.eq.s32.totalorder %s17, 0
      %p112 = por %p110, %p111
      %p113 = scmp.le.s32.totalorder 1, %s11
      %p114 = scmp.lt.s32.totalorder %s11, 3
      %p115 = pnand %p113, %p114
      %p116 = pneg %p115
      // Predicated region
      $region9: #{tpu_custom_call.1} parent=5 // pred_check
        _
      $region10: #{tpu_custom_call.1} parent=5 // pred_check_branch
        %118 = sbr.rel (%p115) target = $region12
      $region11: #{tpu_custom_call.1} parent=5 // pred_region
        %s119 = ssub.s32 %s11, 1
      $region12: #{tpu_custom_call.1} parent=5 // pred_fallthru
        _
      %p120 = scmp.lt.s32.totalorder %s11, 2
      // Predicated region
      $region13: #{tpu_custom_call.1} parent=5 // pred_check
        %p121 = pneg %p120
      $region14: #{tpu_custom_call.1} parent=5 // pred_check_branch
        %123 = sbr.rel (%p121) target = $region16
      $region15: #{tpu_custom_call.1} parent=5 // pred_region
        // Predicated region
        $region17: #{tpu_custom_call.1} parent=15 // pred_check
          %p124 = pneg %p45
        $region18: #{tpu_custom_call.1} parent=15 // pred_check_branch
          %126 = sbr.rel (%p124) target = $region20
        $region19: #{tpu_custom_call.1} parent=15 // pred_region
          %s127 = smul.u32 2, %s19
          %p128 = scmp.lt.s32.totalorder %s18, 1
          %s129 = scalar_select %p128, %s18, 1
          %p130 = scmp.lt.s32.totalorder %s127, 1
          %s131 = scalar_select %p130, %s127, 1
          %s132 = smul.addr %s129, 2
          %s133 = sadd.s32 %s131, %s132
          %s134 = smul.addr %s133, 4
          %s135 = scalar_lea.vmem %s0, %s134
          %s136 = smul.u32 2, %s19
        $region20: #{tpu_custom_call.1} parent=15 // pred_fallthru
          _
        // Predicated region
        $region21: #{tpu_custom_call.1} parent=15 // pred_check
          %p137 = pneg %p71
        $region22: #{tpu_custom_call.1} parent=15 // pred_check_branch
          %139 = sbr.rel (%p137) target = $region24
        $region23: #{tpu_custom_call.1} parent=15 // pred_region
          %p140 = scmp.lt.s32.totalorder %s18, 1
          %s141 = scalar_select %p140, %s18, 1
          %s142 = smul.addr %s141, 14
          %s143 = smul.addr %s142, 4
          %s144 = scalar_lea.vmem %s1, %s143
        $region24: #{tpu_custom_call.1} parent=15 // pred_fallthru
          _
      $region16: #{tpu_custom_call.1} parent=5 // pred_fallthru
        _
      %p145 = scmp.le.s32.totalorder 1, %s11
      %p146 = scmp.lt.s32.totalorder %s11, 3
      %p147 = pnand %p145, %p146
      %p148 = pneg %p147
      // Predicated region
      $region25: #{tpu_custom_call.1} parent=5 // pred_check
        _
      $region26: #{tpu_custom_call.1} parent=5 // pred_check_branch
        %150 = sbr.rel (%p147) target = $region28
      $region27: #{tpu_custom_call.1} parent=5 // pred_region
        %s151 = ssub.s32 %s11, 1
        %s152 = smul.u32 2, %s21
        %p153 = scmp.lt.s32.totalorder %s20, 1
        %s154 = scalar_select %p153, %s20, 1
        %p155 = scmp.lt.s32.totalorder %s152, 1
        %s156 = scalar_select %p155, %s152, 1
        %s157 = smul.addr %s154, 2
        %s158 = sadd.s32 %s156, %s157
        %s159 = smul.addr %s158, 4
        %s160 = scalar_lea.vmem %s0, %s159
        %p161 = pneg %p51
        %p162 = pneg %p48
        %p163 = scmp.lt.s32.totalorder %s20, 1
        %s164 = scalar_select %p163, %s20, 1
        %s165 = smul.addr %s164, 14
        %s166 = smul.addr %s165, 4
        %s167 = scalar_lea.vmem %s1, %s166
        %p168 = pneg %p77
        %p169 = pneg %p74
        %p170 = pneg %p105
        %p171 = pneg %p102
        %s172 = sand.u32 %s92, 1
        %s173 = scalar_lea.sflag [#allocation3], %s172
        %s174 = sand.u32 %s92, 1
        %s175 = smul.addr %s174, 16
        %s176 = scalar_lea.vmem [#allocation2], %s175
        %s177 = smul.u32 2, %s21
        %p178 = scmp.lt.s32.totalorder %s20, 1
        %s179 = scalar_select %p178, %s20, 1
        %p180 = scmp.lt.s32.totalorder %s177, 1
        %s181 = scalar_select %p180, %s177, 1
        %s182 = smul.addr %s179, 2
        %s183 = sadd.s32 %s181, %s182
        %s184 = smul.addr %s183, 4
        %s185 = scalar_lea.vmem %s0, %s184
        %s186 = smul.u32 2, %s21
        %p187 = scmp.lt.s32.totalorder %s20, 1
        %s188 = scalar_select %p187, %s20, 1
        %s189 = smul.addr %s188, 14
        %s190 = smul.addr %s189, 4
        %s191 = scalar_lea.vmem %s1, %s190
        %s192 = smul.u32 2, %s21
        %v194 = vld [vmem:[%s185] sm:$0xf]
        %v195 = vld [vmem:[%s185 + $0x4] sm:$0xf]
        %v196 = vld [vmem:[%s191] sm:$0xf]
        %v197 = vld [vmem:[%s191 + $0x4] sm:$0xf]
        %v198 = vld [vmem:[%s191 + $0x8] sm:$0xf]
        %v199 = vld [vmem:[%s191 + $0xc] sm:$0xf]
        %v200 = vld [vmem:[%s191 + $0x10] sm:$0xf]
        %v201 = vld [vmem:[%s191 + $0x14] sm:$0xf]
        %v202 = vld [vmem:[%s191 + $0x18] sm:$0xf]
        %v203 = vld [vmem:[%s191 + $0x1c] sm:$0xf]
        %v204 = vld [vmem:[%s191 + $0x20] sm:$0xf]
        %v205 = vld [vmem:[%s191 + $0x24] sm:$0xf]
        %v206 = vld [vmem:[%s191 + $0x28] sm:$0xf]
        %v207 = vld [vmem:[%s191 + $0x2c] sm:$0xf]
        %v208 = vld [vmem:[%s191 + $0x30] sm:$0xf]
        %v209 = vld [vmem:[%s191 + $0x34] sm:$0x7]
        %v212 = vunpack.c.l.b16 %v194
        %v213 = vunpack.c.l.b16 %v195
        %v214 = vpack.c.b16 %v213, %v212
        %v229 = vunpack.c.l.b16 %v196
        %v230 = vunpack.c.l.b16 %v197
        %v231 = vunpack.c.l.b16 %v198
        %v232 = vunpack.c.l.b16 %v199
        %v233 = vunpack.c.l.b16 %v200
        %v234 = vunpack.c.l.b16 %v201
        %v235 = vunpack.c.l.b16 %v202
        %v236 = vunpack.c.l.b16 %v203
        %v237 = vunpack.c.l.b16 %v204
        %v238 = vunpack.c.l.b16 %v205
        %v239 = vunpack.c.l.b16 %v206
        %v240 = vunpack.c.l.b16 %v207
        %v241 = vunpack.c.l.b16 %v208
        %v242 = vunpack.c.l.b16 %v209
        %v243 = vpack.c.b16 %v230, %v229
        %v244 = vpack.c.b16 %v232, %v231
        %v245 = vpack.c.b16 %v234, %v233
        %v246 = vpack.c.b16 %v236, %v235
        %v247 = vpack.c.b16 %v238, %v237
        %v248 = vpack.c.b16 %v240, %v239
        %v249 = vpack.c.b16 %v242, %v241
        %vm256 = vcmask 900096
        %v258 = vsel %vm256, %v214, 0
        %vm260 = vcmask 1046528
        %v262 = vsel %vm260, %v249, 0
        %264 = vmatpush.bf16.msra.mxu0 0
        %265 = vmatpush.bf16.msra.mxu0 %v262
        %266 = vmatpush.bf16.msra.mxu0 %v248
        %267 = vmatpush.bf16.msra.mxu0 %v247
        %268 = vmatpush.bf16.msra.mxu0 %v246
        %269 = vmatpush.bf16.msra.mxu0 %v245
        %270 = vmatpush.bf16.msra.mxu0 %v244
        %271 = vmatpush.bf16.msra.mxu0 %v243
        %272 = vmatmul.bf16.gmra.mxu0 %v258
        %v273 = vpop.f32.mrf.mxu0
        %v274 = vadd.f32 0.0, %v273
        %v275 = vpop.f32.mrf.mxu0
        %v276 = vadd.f32 0.0, %v275
        %277 = vdwg.mxu0
        %v278 = vxor.u32 %v274, 2147483648
        %v279 = vxor.u32 %v276, 2147483648
        %v280 = vmul.f32 %v278, 1.442695
        %v281 = vpow.pop %v280
        %v282 = vmul.f32 %v279, 1.442695
        %v283 = vpow.pop %v282
        %v284 = vadd.f32 %v281, 1.0
        %v285 = vadd.f32 %v283, 1.0
        %v286 = vrcp.pop %v284
        %v287 = vmul.f32 %v284, %v286
        %v288 = vsub.f32 1.0, %v287
        %v289 = vmul.f32 %v286, %v288
        %v290 = vadd.f32 %v286, %v289
        %vm291 = vweird.f32 %v284
        %vm292 = vweird.f32 %v286
        %vm293 = vmor %vm291, %vm292
        %v294 = vsel %vm293, %v286, %v290
        %v295 = vand.u32 2147483647, %v284
        %vm296 = vcmp.eq.f32.partialorder %v295, 8.507059e+37
        %v297 = vand.u32 %v284, 2147483648
        %v298 = vor.u32 1.1754944e-38, %v297
        %v299 = vsel %vm296, %v298, %v294
        %v300 = vmul.f32 1.0, %v299
        %v301 = vrcp.pop %v285
        %v302 = vmul.f32 %v285, %v301
        %v303 = vsub.f32 1.0, %v302
        %v304 = vmul.f32 %v301, %v303
        %v305 = vadd.f32 %v301, %v304
        %vm306 = vweird.f32 %v285
        %vm307 = vweird.f32 %v301
        %vm308 = vmor %vm306, %vm307
        %v309 = vsel %vm308, %v301, %v305
        %v310 = vand.u32 2147483647, %v285
        %vm311 = vcmp.eq.f32.partialorder %v310, 8.507059e+37
        %v312 = vand.u32 %v285, 2147483648
        %v313 = vor.u32 1.1754944e-38, %v312
        %v314 = vsel %vm311, %v313, %v309
        %v315 = vmul.f32 1.0, %v314
        %316 = vst [vmem:[%s176] sm:$0xff] %v300
        %317 = vst [vmem:[%s176 + $0x8] sm:$0xff] %v315
        %s318 = sand.u32 %s92, 1
        %s319 = scalar_lea.sflag [#allocation3], %s318
        %s320 = sand.u32 %s92, 1
        %s321 = smul.addr %s320, 16
        %s322 = scalar_lea.vmem [#allocation2], %s321
        // Predicated region
        $region29: #{tpu_custom_call.1} parent=27 // pred_check
          %p323 = pneg %p102
        $region30: #{tpu_custom_call.1} parent=27 // pred_check_branch
          %325 = sbr.rel (%p323) target = $region32
        $region31: #{tpu_custom_call.1} parent=27 // pred_region
          %s326 = smul.u32 2, %s21
          %328 = vsyncadd %s319, 0
          %s329 = smul.addr %s20, 2
          %s330 = sadd.s32 %s326, %s329
          %s331 = smul.addr %s330, 8
          %s332 = scalar_lea.hbm %s2, %s331
          %s333 = sshll.u32 %s322, 4
          %s334 = int_to_ptr.vmem [resolvable:$true] %s333
          %s335 = sshll.u32 %s332, 4
          %s336 = int_to_ptr.hbm [resolvable:$true] %s335
          %341 = dma.vmem_to_hbm [thread:$0]  %s334, 256, %s336, %s319, 128, 128, 8
        $region32: #{tpu_custom_call.1} parent=27 // pred_fallthru
          _
      $region28: #{tpu_custom_call.1} parent=5 // pred_fallthru
        _
      %p342 = scmp.le.s32.totalorder 2, %s11
      // Predicated region
      $region33: #{tpu_custom_call.1} parent=5 // pred_check
        %p343 = pneg %p342
      $region34: #{tpu_custom_call.1} parent=5 // pred_check_branch
        %345 = sbr.rel (%p343) target = $region36
      $region35: #{tpu_custom_call.1} parent=5 // pred_region
        %s346 = ssub.s32 %s11, 2
        // Predicated region
        $region37: #{tpu_custom_call.1} parent=35 // pred_check
          %p347 = pneg %p108
        $region38: #{tpu_custom_call.1} parent=35 // pred_check_branch
          %349 = sbr.rel (%p347) target = $region40
        $region39: #{tpu_custom_call.1} parent=35 // pred_region
          %s350 = sand.u32 %s93, 1
          %s351 = scalar_lea.sflag [#allocation3], %s350
          %s352 = sand.u32 %s93, 1
          %s353 = smul.addr %s352, 16
          %s354 = scalar_lea.vmem [#allocation2], %s353
          %356 = dma.done %s351, 256
        $region40: #{tpu_custom_call.1} parent=35 // pred_fallthru
          _
      $region36: #{tpu_custom_call.1} parent=5 // pred_fallthru
        _
    $region6: #{tpu_custom_call.1} parent=1 // loop_footer
      %s15 = sadd.s32 1, %s11
    $region7: #{tpu_custom_call.1} parent=1 // loop_footer_branch
      %10 = sbr.rel target = $region3
    $region8: #{tpu_custom_call.1} parent=1 // loop_exit
      _
    %357 = vsyncpa [#allocation3], 1
    %s358 = scalar_lea.sflag [#allocation3], 1
    %359 = vsyncpa %s358, 1

</llo_original>
